<compile_context>
chip_gen: v7x
topology: tpu7x:2x2x1
jax: 0.10.0
libtpu: 0.0.40
codegen_flags: <defaults>
</compile_context>

<pallas_src>
import functools

import jax
import jax.numpy as jnp
from jax.experimental import pallas as pl
from jax.experimental.pallas import tpu as pltpu

_LANES = 128
_SUBLANES = 8
_LBL_LANES_MAX = 32           # labels lanes per packed block (=> chunks per tile)
_TARGET_TILE_BYTES = 4 << 20  # ~4 MiB logits tile per pipeline buffer


def _round_up(x, m):
    return ((x + m - 1) // m) * m


def _plan(n, c, itemsize):
    """Pick (tile_n, lbl_lanes, chunk_rows) with tile_n == lbl_lanes * chunk_rows."""
    c_pad = _round_up(c, _LANES)            # VMEM lane padding of the class dim
    bytes_per_row = c_pad * itemsize
    rows_budget = max(32, (_TARGET_TILE_BYTES // bytes_per_row) // 32 * 32)
    n_up32 = _round_up(n, 32)
    if n_up32 <= 256 or rows_budget <= 256:
        tile_n = min(rows_budget, n_up32)   # multiple of 32, <= 256
        chunk_rows = _SUBLANES
        lbl_lanes = tile_n // _SUBLANES
    else:
        tile_n = min((rows_budget // 256) * 256, _round_up(n, 256))  # multiple of 256
        lbl_lanes = _LBL_LANES_MAX
        chunk_rows = tile_n // _LBL_LANES_MAX                        # multiple of 8
    return tile_n, lbl_lanes, chunk_rows


def _mae_partial_kernel(col_ids_ref, logits_ref, labels_ref, out_ref, *,
                        last_rows, lbl_lanes, chunk_rows, ragged):
    col_ids = col_ids_ref[...]                      # (1, C) int32, resident

    def tile_sum(masked):
        total = jnp.zeros((), jnp.float32)
        for j in range(lbl_lanes):                  # static, unrolled
            r0 = j * chunk_rows
            x = logits_ref[r0:r0 + chunk_rows, :].astype(jnp.float32)   # (chunk, C)
            lbl_col = labels_ref[:, j:j + 1]                            # (chunk, 1)
            one_hot = (col_ids == lbl_col).astype(jnp.float32)          # (chunk, C)
            err = jnp.abs(x - one_hot)
            if masked:
                # Only reached on the last (partial) tile: zero rows >= N.
                row = jax.lax.broadcasted_iota(jnp.int32, (chunk_rows, 1), 0) + r0
                err = jnp.where(row < last_rows, err, 0.0)
            total = total + jnp.sum(err)
        return total

    def write(total):
        out_ref[...] = jnp.broadcast_to(jnp.reshape(total, (1, 1, 1)),
                                        (1, _SUBLANES, _LANES))

    if not ragged:
        write(tile_sum(False))
    else:
        is_last = pl.program_id(0) == pl.num_programs(0) - 1

        @pl.when(is_last)
        def _():
            write(tile_sum(True))

        @pl.when(jnp.logical_not(is_last))
        def _():
            write(tile_sum(False))


def improved_mean_absolute_error(logits, labels):
    """logits: (N, C) float32/bfloat16; labels: (N,) int class indices -> scalar f32."""
    n, c = logits.shape
    itemsize = jnp.dtype(logits.dtype).itemsize
    tile_n, lbl_lanes, chunk_rows = _plan(n, c, itemsize)
    num_tiles = -(-n // tile_n)
    ragged = (n % tile_n) != 0
    last_rows = n - (num_tiles - 1) * tile_n

    # Lane-dense labels repack (negligible cost: N int32s).  Packed layout:
    #   packed[t*chunk_rows + q, j] = labels[t*tile_n + j*chunk_rows + q]
    # so grid step t, chunk j reads its labels from column j of its block.
    total_rows = num_tiles * tile_n
    lab = labels.reshape(-1).astype(jnp.int32)
    lab = jnp.pad(lab, (0, total_rows - n), constant_values=c)  # pad -> all-zero one-hot
    lab_packed = (lab.reshape(num_tiles, lbl_lanes, chunk_rows)
                  .transpose(0, 2, 1)
                  .reshape(num_tiles * chunk_rows, lbl_lanes))

    # Hoisted class-index iota (constant index_map keeps it resident in VMEM).
    col_ids = jax.lax.broadcasted_iota(jnp.int32, (1, c), 1)

    # VMEM budgeting with physical layout padding (lane-pad C to 128, 2x buffers).
    c_pad = _round_up(c, _LANES)
    logits_tile_bytes = tile_n * c_pad * itemsize
    labels_tile_bytes = chunk_rows * _LANES * 4
    out_tile_bytes = _SUBLANES * _LANES * 4
    col_ids_bytes = _SUBLANES * c_pad * 4
    needed = 2 * (logits_tile_bytes + labels_tile_bytes + out_tile_bytes + col_ids_bytes)
    vmem_limit = int(min(max(needed + (8 << 20), 16 << 20), 48 << 20))

    kernel = functools.partial(_mae_partial_kernel, last_rows=last_rows,
                               lbl_lanes=lbl_lanes, chunk_rows=chunk_rows,
                               ragged=ragged)

    partials = pl.pallas_call(
        kernel,
        out_shape=jax.ShapeDtypeStruct((num_tiles, _SUBLANES, _LANES), jnp.float32),
        grid=(num_tiles,),
        in_specs=[
            pl.BlockSpec((1, c), lambda i: (0, 0)),                  # col ids (resident)
            pl.BlockSpec((tile_n, c), lambda i: (i, 0)),             # logits tile
            pl.BlockSpec((chunk_rows, lbl_lanes), lambda i: (i, 0)),  # packed labels
        ],
        out_specs=pl.BlockSpec((1, _SUBLANES, _LANES), lambda i: (i, 0, 0)),
        compiler_params=pltpu.CompilerParams(
            dimension_semantics=("parallel",),
            vmem_limit_bytes=vmem_limit,
        ),
        cost_estimate=pl.CostEstimate(
            flops=4 * n * c,
            transcendentals=0,
            bytes_accessed=n * c * itemsize + total_rows * 4
            + int(num_tiles) * _SUBLANES * _LANES * 4 + c * 4,
        ),
    )(col_ids, logits, lab_packed)

    # Tiny final reduce + single normalization outside the kernel.  (Single
    # divide by N*C vs torch's mean-over-C-then-N differs only in low-order
    # f32 bits.)  Out-of-range labels silently yield an all-zero one-hot row.
    return jnp.sum(partials[:, 0, 0]) / jnp.float32(n * c)


if __name__ == "__main__":
    key = jax.random.PRNGKey(0)
    k1, k2, k3, k4, k5, k6 = jax.random.split(key, 6)

    def ref_loss(logits, labels):
        one_hot = jax.nn.one_hot(labels, logits.shape[1], dtype=jnp.float32)
        per_sample = jnp.mean(jnp.abs(logits.astype(jnp.float32) - one_hot), axis=1)
        return jnp.mean(per_sample, axis=0)

    # Case 1: small f32 batch (partial tile, fully masked tail chunks).
    N, C = 8, 32
    logits = jax.random.normal(k1, (N, C), dtype=jnp.float32)
    labels = jax.random.randint(k2, (N,), 0, C, dtype=jnp.int32)
    loss = jax.block_until_ready(improved_mean_absolute_error(logits, labels))
    assert jnp.allclose(loss, ref_loss(logits, labels), atol=1e-6, rtol=1e-6), (
        loss, ref_loss(logits, labels))

    # Case 2: ragged batch with native bf16 logits (last-tile masking).
    N2, C2 = 13, 32
    logits2 = jax.random.normal(k3, (N2, C2), dtype=jnp.bfloat16)
    labels2 = jax.random.randint(k4, (N2,), 0, C2, dtype=jnp.int32)
    loss2 = jax.block_until_ready(improved_mean_absolute_error(logits2, labels2))
    assert jnp.allclose(loss2, ref_loss(logits2, labels2), atol=1e-5, rtol=1e-5), (
        loss2, ref_loss(logits2, labels2))

    # Case 3: multi-tile + ragged last tile (exercises labels packing, parallel
    # grid, and the unmasked fast path on the full tiles).
    N3, C3 = 20000, 32
    logits3 = jax.random.normal(k5, (N3, C3), dtype=jnp.float32)
    labels3 = jax.random.randint(k6, (N3,), 0, C3, dtype=jnp.int32)
    loss3 = jax.block_until_ready(improved_mean_absolute_error(logits3, labels3))
    assert jnp.allclose(loss3, ref_loss(logits3, labels3), atol=2e-5, rtol=2e-5), (
        loss3, ref_loss(logits3, labels3))

    print("KERNEL_OK")
</pallas_src>

<mosaic_0001>
module attributes {stable_mosaic.version = 11 : i64} {
  func.func @_mae_partial_kernel(%arg0: i32, %arg1: memref<1x32xi32, #tpu.memory_space<vmem>>, %arg2: memref<32x32xf32, #tpu.memory_space<vmem>>, %arg3: memref<8x4xi32, #tpu.memory_space<vmem>>, %arg4: memref<1x8x128xf32, #tpu.memory_space<vmem>>) attributes {dimension_semantics = [#tpu.dimension_semantics<parallel>], iteration_bounds = array<i64: 1>, scalar_prefetch = 0 : i64, scratch_operands = 0 : i64, tpu.core_type = #tpu.core_type<tc>, window_params = [{pipeline_mode = #tpu.pipeline_mode<synchronous>, transform_indices = @transform_0, window_bounds = array<i64: 1, 32>}, {transform_indices = @transform_1, window_bounds = array<i64: 32, 32>}, {transform_indices = @transform_2, window_bounds = array<i64: 8, 4>}, {transform_indices = @transform_3, window_bounds = array<i64: 1, 8, 128>}]} {
    %c0 = arith.constant 0 : index
    %c0_0 = arith.constant 0 : index
    %0 = vector.load %arg1[%c0, %c0_0] : memref<1x32xi32, #tpu.memory_space<vmem>>, vector<1x32xi32>
    %c0_i32 = arith.constant 0 : i32
    %1 = arith.cmpi eq, %arg0, %c0_i32 : i32
    %2 = arith.extui %1 : i1 to i32
    %c0_i32_1 = arith.constant 0 : i32
    %3 = arith.cmpi ne, %2, %c0_i32_1 : i32
    scf.if %3 {
      %c0_3 = arith.constant 0 : index
      %c0_4 = arith.constant 0 : index
      %7 = vector.load %arg2[%c0_3, %c0_4] : memref<32x32xf32, #tpu.memory_space<vmem>>, vector<8x32xf32>
      %c0_5 = arith.constant 0 : index
      %c0_6 = arith.constant 0 : index
      %8 = vector.load %arg3[%c0_5, %c0_6] : memref<8x4xi32, #tpu.memory_space<vmem>>, vector<8x1xi32>
      %9 = vector.broadcast %0 : vector<1x32xi32> to vector<8x32xi32>
      %10 = vector.broadcast %8 : vector<8x1xi32> to vector<8x32xi32>
      %11 = arith.cmpi eq, %9, %10 : vector<8x32xi32>
      %12 = arith.extui %11 : vector<8x32xi1> to vector<8x32xi32>
      %13 = arith.sitofp %12 : vector<8x32xi32> to vector<8x32xf32>
      %14 = arith.subf %7, %13 : vector<8x32xf32>
      %15 = math.absf %14 : vector<8x32xf32>
      %16 = tpu.iota {dimensions = array<i32: 0>} : vector<8x1xi32>
      %c0_i32_7 = arith.constant 0 : i32
      %17 = vector.broadcast %c0_i32_7 : i32 to vector<8x1xi32>
      %18 = arith.addi %16, %17 : vector<8x1xi32>
      %c8_i32 = arith.constant 8 : i32
      %19 = vector.broadcast %c8_i32 : i32 to vector<8x1xi32>
      %20 = arith.cmpi slt, %18, %19 : vector<8x1xi32>
      %cst = arith.constant 0.000000e+00 : f32
      %21 = vector.shape_cast %20 : vector<8x1xi1> to vector<8x1xi1>
      %22 = vector.broadcast %21 : vector<8x1xi1> to vector<8x32xi1>
      %23 = vector.broadcast %cst : f32 to vector<8x32xf32>
      %24 = arith.select %22, %15, %23 : vector<8x32xi1>, vector<8x32xf32>
      %25 = vector.shape_cast %24 : vector<8x32xf32> to vector<1x8x32xf32>
      %cst_8 = arith.constant dense<0.000000e+00> : vector<1xf32>
      %26 = vector.multi_reduction <add>, %25, %cst_8 [1, 2] : vector<1x8x32xf32> to vector<1xf32>
      %27 = vector.shape_cast %26 : vector<1xf32> to vector<1x1x1xf32>
      %28 = vector.extract %27[0, 0, 0] : f32 from vector<1x1x1xf32>
      %cst_9 = arith.constant 0.000000e+00 : f32
      %29 = arith.addf %cst_9, %28 : f32
      %c8 = arith.constant 8 : index
      %c0_10 = arith.constant 0 : index
      %30 = vector.load %arg2[%c8, %c0_10] : memref<32x32xf32, #tpu.memory_space<vmem>>, vector<8x32xf32>
      %c0_11 = arith.constant 0 : index
      %c1 = arith.constant 1 : index
      %31 = vector.load %arg3[%c0_11, %c1] : memref<8x4xi32, #tpu.memory_space<vmem>>, vector<8x1xi32>
      %32 = vector.broadcast %0 : vector<1x32xi32> to vector<8x32xi32>
      %33 = vector.broadcast %31 : vector<8x1xi32> to vector<8x32xi32>
      %34 = arith.cmpi eq, %32, %33 : vector<8x32xi32>
      %35 = arith.extui %34 : vector<8x32xi1> to vector<8x32xi32>
      %36 = arith.sitofp %35 : vector<8x32xi32> to vector<8x32xf32>
      %37 = arith.subf %30, %36 : vector<8x32xf32>
      %38 = math.absf %37 : vector<8x32xf32>
      %39 = tpu.iota {dimensions = array<i32: 0>} : vector<8x1xi32>
      %c8_i32_12 = arith.constant 8 : i32
      %40 = vector.broadcast %c8_i32_12 : i32 to vector<8x1xi32>
      %41 = arith.addi %39, %40 : vector<8x1xi32>
      %c8_i32_13 = arith.constant 8 : i32
      %42 = vector.broadcast %c8_i32_13 : i32 to vector<8x1xi32>
      %43 = arith.cmpi slt, %41, %42 : vector<8x1xi32>
      %cst_14 = arith.constant 0.000000e+00 : f32
      %44 = vector.shape_cast %43 : vector<8x1xi1> to vector<8x1xi1>
      %45 = vector.broadcast %44 : vector<8x1xi1> to vector<8x32xi1>
      %46 = vector.broadcast %cst_14 : f32 to vector<8x32xf32>
      %47 = arith.select %45, %38, %46 : vector<8x32xi1>, vector<8x32xf32>
      %48 = vector.shape_cast %47 : vector<8x32xf32> to vector<1x8x32xf32>
      %cst_15 = arith.constant dense<0.000000e+00> : vector<1xf32>
      %49 = vector.multi_reduction <add>, %48, %cst_15 [1, 2] : vector<1x8x32xf32> to vector<1xf32>
      %50 = vector.shape_cast %49 : vector<1xf32> to vector<1x1x1xf32>
      %51 = vector.extract %50[0, 0, 0] : f32 from vector<1x1x1xf32>
      %52 = arith.addf %29, %51 : f32
      %c16 = arith.constant 16 : index
      %c0_16 = arith.constant 0 : index
      %53 = vector.load %arg2[%c16, %c0_16] : memref<32x32xf32, #tpu.memory_space<vmem>>, vector<8x32xf32>
      %c0_17 = arith.constant 0 : index
      %c2 = arith.constant 2 : index
      %54 = vector.load %arg3[%c0_17, %c2] : memref<8x4xi32, #tpu.memory_space<vmem>>, vector<8x1xi32>
      %55 = vector.broadcast %0 : vector<1x32xi32> to vector<8x32xi32>
      %56 = vector.broadcast %54 : vector<8x1xi32> to vector<8x32xi32>
      %57 = arith.cmpi eq, %55, %56 : vector<8x32xi32>
      %58 = arith.extui %57 : vector<8x32xi1> to vector<8x32xi32>
      %59 = arith.sitofp %58 : vector<8x32xi32> to vector<8x32xf32>
      %60 = arith.subf %53, %59 : vector<8x32xf32>
      %61 = math.absf %60 : vector<8x32xf32>
      %62 = tpu.iota {dimensions = array<i32: 0>} : vector<8x1xi32>
      %c16_i32 = arith.constant 16 : i32
      %63 = vector.broadcast %c16_i32 : i32 to vector<8x1xi32>
      %64 = arith.addi %62, %63 : vector<8x1xi32>
      %c8_i32_18 = arith.constant 8 : i32
      %65 = vector.broadcast %c8_i32_18 : i32 to vector<8x1xi32>
      %66 = arith.cmpi slt, %64, %65 : vector<8x1xi32>
      %cst_19 = arith.constant 0.000000e+00 : f32
      %67 = vector.shape_cast %66 : vector<8x1xi1> to vector<8x1xi1>
      %68 = vector.broadcast %67 : vector<8x1xi1> to vector<8x32xi1>
      %69 = vector.broadcast %cst_19 : f32 to vector<8x32xf32>
      %70 = arith.select %68, %61, %69 : vector<8x32xi1>, vector<8x32xf32>
      %71 = vector.shape_cast %70 : vector<8x32xf32> to vector<1x8x32xf32>
      %cst_20 = arith.constant dense<0.000000e+00> : vector<1xf32>
      %72 = vector.multi_reduction <add>, %71, %cst_20 [1, 2] : vector<1x8x32xf32> to vector<1xf32>
      %73 = vector.shape_cast %72 : vector<1xf32> to vector<1x1x1xf32>
      %74 = vector.extract %73[0, 0, 0] : f32 from vector<1x1x1xf32>
      %75 = arith.addf %52, %74 : f32
      %c24 = arith.constant 24 : index
      %c0_21 = arith.constant 0 : index
      %76 = vector.load %arg2[%c24, %c0_21] : memref<32x32xf32, #tpu.memory_space<vmem>>, vector<8x32xf32>
      %c0_22 = arith.constant 0 : index
      %c3 = arith.constant 3 : index
      %77 = vector.load %arg3[%c0_22, %c3] : memref<8x4xi32, #tpu.memory_space<vmem>>, vector<8x1xi32>
      %78 = vector.broadcast %0 : vector<1x32xi32> to vector<8x32xi32>
      %79 = vector.broadcast %77 : vector<8x1xi32> to vector<8x32xi32>
      %80 = arith.cmpi eq, %78, %79 : vector<8x32xi32>
      %81 = arith.extui %80 : vector<8x32xi1> to vector<8x32xi32>
      %82 = arith.sitofp %81 : vector<8x32xi32> to vector<8x32xf32>
      %83 = arith.subf %76, %82 : vector<8x32xf32>
      %84 = math.absf %83 : vector<8x32xf32>
      %85 = tpu.iota {dimensions = array<i32: 0>} : vector<8x1xi32>
      %c24_i32 = arith.constant 24 : i32
      %86 = vector.broadcast %c24_i32 : i32 to vector<8x1xi32>
      %87 = arith.addi %85, %86 : vector<8x1xi32>
      %c8_i32_23 = arith.constant 8 : i32
      %88 = vector.broadcast %c8_i32_23 : i32 to vector<8x1xi32>
      %89 = arith.cmpi slt, %87, %88 : vector<8x1xi32>
      %cst_24 = arith.constant 0.000000e+00 : f32
      %90 = vector.shape_cast %89 : vector<8x1xi1> to vector<8x1xi1>
      %91 = vector.broadcast %90 : vector<8x1xi1> to vector<8x32xi1>
      %92 = vector.broadcast %cst_24 : f32 to vector<8x32xf32>
      %93 = arith.select %91, %84, %92 : vector<8x32xi1>, vector<8x32xf32>
      %94 = vector.shape_cast %93 : vector<8x32xf32> to vector<1x8x32xf32>
      %cst_25 = arith.constant dense<0.000000e+00> : vector<1xf32>
      %95 = vector.multi_reduction <add>, %94, %cst_25 [1, 2] : vector<1x8x32xf32> to vector<1xf32>
      %96 = vector.shape_cast %95 : vector<1xf32> to vector<1x1x1xf32>
      %97 = vector.extract %96[0, 0, 0] : f32 from vector<1x1x1xf32>
      %98 = arith.addf %75, %97 : f32
      %99 = vector.broadcast %98 : f32 to vector<1x1x1xf32>
      %100 = vector.shape_cast %99 : vector<1x1x1xf32> to vector<1x1x1xf32>
      %101 = vector.broadcast %100 : vector<1x1x1xf32> to vector<1x8x128xf32>
      %c0_26 = arith.constant 0 : index
      %c0_27 = arith.constant 0 : index
      %c0_28 = arith.constant 0 : index
      %102 = vector.load %arg4[%c0_26, %c0_27, %c0_28] : memref<1x8x128xf32, #tpu.memory_space<vmem>>, vector<1x8x128xf32>
      tpu.vector_store %arg4[%c0_26, %c0_27, %c0_28], %101 {strides = array<i32>} : memref<1x8x128xf32, #tpu.memory_space<vmem>>, vector<1x8x128xf32>,
    } else {
    }
    %true = arith.constant true
    %4 = arith.xori %1, %true : i1
    %5 = arith.extui %4 : i1 to i32
    %c0_i32_2 = arith.constant 0 : i32
    %6 = arith.cmpi ne, %5, %c0_i32_2 : i32
    scf.if %6 {
      %c0_3 = arith.constant 0 : index
      %c0_4 = arith.constant 0 : index
      %7 = vector.load %arg2[%c0_3, %c0_4] : memref<32x32xf32, #tpu.memory_space<vmem>>, vector<8x32xf32>
      %c0_5 = arith.constant 0 : index
      %c0_6 = arith.constant 0 : index
      %8 = vector.load %arg3[%c0_5, %c0_6] : memref<8x4xi32, #tpu.memory_space<vmem>>, vector<8x1xi32>
      %9 = vector.broadcast %0 : vector<1x32xi32> to vector<8x32xi32>
      %10 = vector.broadcast %8 : vector<8x1xi32> to vector<8x32xi32>
      %11 = arith.cmpi eq, %9, %10 : vector<8x32xi32>
      %12 = arith.extui %11 : vector<8x32xi1> to vector<8x32xi32>
      %13 = arith.sitofp %12 : vector<8x32xi32> to vector<8x32xf32>
      %14 = arith.subf %7, %13 : vector<8x32xf32>
      %15 = math.absf %14 : vector<8x32xf32>
      %16 = vector.shape_cast %15 : vector<8x32xf32> to vector<1x8x32xf32>
      %cst = arith.constant dense<0.000000e+00> : vector<1xf32>
      %17 = vector.multi_reduction <add>, %16, %cst [1, 2] : vector<1x8x32xf32> to vector<1xf32>
      %18 = vector.shape_cast %17 : vector<1xf32> to vector<1x1x1xf32>
      %19 = vector.extract %18[0, 0, 0] : f32 from vector<1x1x1xf32>
      %cst_7 = arith.constant 0.000000e+00 : f32
      %20 = arith.addf %cst_7, %19 : f32
      %c8 = arith.constant 8 : index
      %c0_8 = arith.constant 0 : index
      %21 = vector.load %arg2[%c8, %c0_8] : memref<32x32xf32, #tpu.memory_space<vmem>>, vector<8x32xf32>
      %c0_9 = arith.constant 0 : index
      %c1 = arith.constant 1 : index
      %22 = vector.load %arg3[%c0_9, %c1] : memref<8x4xi32, #tpu.memory_space<vmem>>, vector<8x1xi32>
      %23 = vector.broadcast %0 : vector<1x32xi32> to vector<8x32xi32>
      %24 = vector.broadcast %22 : vector<8x1xi32> to vector<8x32xi32>
      %25 = arith.cmpi eq, %23, %24 : vector<8x32xi32>
      %26 = arith.extui %25 : vector<8x32xi1> to vector<8x32xi32>
      %27 = arith.sitofp %26 : vector<8x32xi32> to vector<8x32xf32>
      %28 = arith.subf %21, %27 : vector<8x32xf32>
      %29 = math.absf %28 : vector<8x32xf32>
      %30 = vector.shape_cast %29 : vector<8x32xf32> to vector<1x8x32xf32>
      %cst_10 = arith.constant dense<0.000000e+00> : vector<1xf32>
      %31 = vector.multi_reduction <add>, %30, %cst_10 [1, 2] : vector<1x8x32xf32> to vector<1xf32>
      %32 = vector.shape_cast %31 : vector<1xf32> to vector<1x1x1xf32>
      %33 = vector.extract %32[0, 0, 0] : f32 from vector<1x1x1xf32>
      %34 = arith.addf %20, %33 : f32
      %c16 = arith.constant 16 : index
      %c0_11 = arith.constant 0 : index
      %35 = vector.load %arg2[%c16, %c0_11] : memref<32x32xf32, #tpu.memory_space<vmem>>, vector<8x32xf32>
      %c0_12 = arith.constant 0 : index
      %c2 = arith.constant 2 : index
      %36 = vector.load %arg3[%c0_12, %c2] : memref<8x4xi32, #tpu.memory_space<vmem>>, vector<8x1xi32>
      %37 = vector.broadcast %0 : vector<1x32xi32> to vector<8x32xi32>
      %38 = vector.broadcast %36 : vector<8x1xi32> to vector<8x32xi32>
      %39 = arith.cmpi eq, %37, %38 : vector<8x32xi32>
      %40 = arith.extui %39 : vector<8x32xi1> to vector<8x32xi32>
      %41 = arith.sitofp %40 : vector<8x32xi32> to vector<8x32xf32>
      %42 = arith.subf %35, %41 : vector<8x32xf32>
      %43 = math.absf %42 : vector<8x32xf32>
      %44 = vector.shape_cast %43 : vector<8x32xf32> to vector<1x8x32xf32>
      %cst_13 = arith.constant dense<0.000000e+00> : vector<1xf32>
      %45 = vector.multi_reduction <add>, %44, %cst_13 [1, 2] : vector<1x8x32xf32> to vector<1xf32>
      %46 = vector.shape_cast %45 : vector<1xf32> to vector<1x1x1xf32>
      %47 = vector.extract %46[0, 0, 0] : f32 from vector<1x1x1xf32>
      %48 = arith.addf %34, %47 : f32
      %c24 = arith.constant 24 : index
      %c0_14 = arith.constant 0 : index
      %49 = vector.load %arg2[%c24, %c0_14] : memref<32x32xf32, #tpu.memory_space<vmem>>, vector<8x32xf32>
      %c0_15 = arith.constant 0 : index
      %c3 = arith.constant 3 : index
      %50 = vector.load %arg3[%c0_15, %c3] : memref<8x4xi32, #tpu.memory_space<vmem>>, vector<8x1xi32>
      %51 = vector.broadcast %0 : vector<1x32xi32> to vector<8x32xi32>
      %52 = vector.broadcast %50 : vector<8x1xi32> to vector<8x32xi32>
      %53 = arith.cmpi eq, %51, %52 : vector<8x32xi32>
      %54 = arith.extui %53 : vector<8x32xi1> to vector<8x32xi32>
      %55 = arith.sitofp %54 : vector<8x32xi32> to vector<8x32xf32>
      %56 = arith.subf %49, %55 : vector<8x32xf32>
      %57 = math.absf %56 : vector<8x32xf32>
      %58 = vector.shape_cast %57 : vector<8x32xf32> to vector<1x8x32xf32>
      %cst_16 = arith.constant dense<0.000000e+00> : vector<1xf32>
      %59 = vector.multi_reduction <add>, %58, %cst_16 [1, 2] : vector<1x8x32xf32> to vector<1xf32>
      %60 = vector.shape_cast %59 : vector<1xf32> to vector<1x1x1xf32>
      %61 = vector.extract %60[0, 0, 0] : f32 from vector<1x1x1xf32>
      %62 = arith.addf %48, %61 : f32
      %63 = vector.broadcast %62 : f32 to vector<1x1x1xf32>
      %64 = vector.shape_cast %63 : vector<1x1x1xf32> to vector<1x1x1xf32>
      %65 = vector.broadcast %64 : vector<1x1x1xf32> to vector<1x8x128xf32>
      %c0_17 = arith.constant 0 : index
      %c0_18 = arith.constant 0 : index
      %c0_19 = arith.constant 0 : index
      %66 = vector.load %arg4[%c0_17, %c0_18, %c0_19] : memref<1x8x128xf32, #tpu.memory_space<vmem>>, vector<1x8x128xf32>
      tpu.vector_store %arg4[%c0_17, %c0_18, %c0_19], %65 {strides = array<i32>} : memref<1x8x128xf32, #tpu.memory_space<vmem>>, vector<1x8x128xf32>,
    } else {
    }
    return
  }
  func.func @transform_0(%arg0: i32) -> (i32, i32) {
    %c0_i32 = arith.constant 0 : i32
    %c0_i32_0 = arith.constant 0 : i32
    %c0_i32_1 = arith.constant 0 : i32
    return %c0_i32, %c0_i32_0 : i32, i32
  }
  func.func @transform_1(%arg0: i32) -> (i32, i32) {
    %c0_i32 = arith.constant 0 : i32
    %c0_i32_0 = arith.constant 0 : i32
    return %arg0, %c0_i32 : i32, i32
  }
  func.func @transform_2(%arg0: i32) -> (i32, i32) {
    %c0_i32 = arith.constant 0 : i32
    %c0_i32_0 = arith.constant 0 : i32
    return %arg0, %c0_i32 : i32, i32
  }
  func.func @transform_3(%arg0: i32) -> (i32, i32, i32) {
    %c0_i32 = arith.constant 0 : i32
    %c0_i32_0 = arith.constant 0 : i32
    %c0_i32_1 = arith.constant 0 : i32
    return %arg0, %c0_i32, %c0_i32_0 : i32, i32, i32
  }
}

</mosaic_0001>

<llo_original>
// kernel: tpu_custom_call.1
$region0: #{tpu_custom_call.1}
  #allocation0 [shape = 'u32[]', space=smem, size = 0x4, offset = 0x4, fixed_abs, tag = 'smem constant byte address 0x4 - core index']
  #allocation1 [shape = 'u32[144,128]{1,0:T(1,128)}', space=vmem, size = 0x12000, scoped, tag = 'internal scratch']
  %s0 = inlined_call_operand.vmem [shape: s32[1,32], index: 0, kind: input, shape index: {}]
  %s1 = inlined_call_operand.vmem [shape: f32[8,32], index: 1, kind: input, shape index: {}]
  %s2 = inlined_call_operand.vmem [shape: s32[8,4], index: 2, kind: input, shape index: {}]
  %s3 = inlined_call_operand.hbm [shape: f32[1,8,128], index: 3, kind: output, shape index: {}]
  %s4 = sld [smem:[#allocation0]]
  $region30: #{tpu_custom_call.1} parent=0
    _
  %s6 = ssub.s32 1, %s4
  %s7 = scalar_select 0, %s6, %s4
  $region1: #{tpu_custom_call.1} parent=0
    #allocation2 [shape = 'u8[4096]{0}', space=vmem, size = 0x1000, scoped, tag = 'output window, operand 0, single buffered']
    #allocation3 [shape = 's32[1]{0}', space=sflag, size = 0x4, scoped, tag = 'scoped memory for tpu_custom_call.1']
    %8 = vsyncpa [#allocation3], 0
    // Predicated region
    $region2: #{tpu_custom_call.1} parent=1 // pred_check
      _
    $region3: #{tpu_custom_call.1} parent=1 // pred_check_branch
      %10 = sbr.rel (0) target = $region5
    $region4: #{tpu_custom_call.1} parent=1 // pred_region
      _
    $region5: #{tpu_custom_call.1} parent=1 // pred_fallthru
      _
    // Predicated region
    $region6: #{tpu_custom_call.1} parent=1 // pred_check
      _
    $region7: #{tpu_custom_call.1} parent=1 // pred_check_branch
      %12 = sbr.rel (0) target = $region9
    $region8: #{tpu_custom_call.1} parent=1 // pred_region
      _
    $region9: #{tpu_custom_call.1} parent=1 // pred_fallthru
      _
    // Predicated region
    $region10: #{tpu_custom_call.1} parent=1 // pred_check
      _
    $region11: #{tpu_custom_call.1} parent=1 // pred_check_branch
      %14 = sbr.rel (0) target = $region13
    $region12: #{tpu_custom_call.1} parent=1 // pred_region
      _
    $region13: #{tpu_custom_call.1} parent=1 // pred_fallthru
      _
    %v15 = vld [vmem:[%s0] sm:$0x1]
    %p16 = scmp.eq.s32.totalorder 0, 0
    // Predicated region
    $region14: #{tpu_custom_call.1} parent=1 // pred_check
      %p17 = pneg %p16
    $region15: #{tpu_custom_call.1} parent=1 // pred_check_branch
      %19 = sbr.rel (%p17) target = $region17
    $region16: #{tpu_custom_call.1} parent=1 // pred_region
      %v20 = vld [vmem:[%s1] sm:$0xff]
      %v21 = vld [vmem:[%s2] sm:$0xff]
      %v22 = vlaneseq
      %v23 = vshrl.u32 %v22, 7
      %v24 = vsub.s32 0, %v23
      %v25 = vrot.slane %v15, %v24
      %26 = vset.pattern.permute.xlu0 0
      %27 = vperm.xlu0 %26, %v21
      %v28 = vpop.permute.xlu0 %27
      %vm29 = vcmp.eq.s32.totalorder %v25, %v28
      %v30 = vsel %vm29, 1, 0
      %v31 = vcvt.s32.f32 %v30
      %v32 = vsub.f32 %v20, %v31
      %v33 = vand.u32 2147483647, %v32
      %v34 = vlaneseq
      %v35 = vshrl.u32 %v34, 7
      %vm36 = vcmp.lt.s32.totalorder %v35, 8
      %v37 = vsel %vm36, 1, 0
      %vm38 = vcmp.eq.s32.totalorder %v37, 1
      %v39 = vsel %vm38, %v33, 0.0
      %vm40 = vcmask 261120
      %v41 = vsel %vm40, %v39, 0.0
      %42 = vadd.xlane.f32.xlu0 %v41
      %v43 = vpop.xlane.xlu0 %42
      %v44 = vrot.slane %v43, 4
      %v45 = vadd.f32 %v43, %v44
      %v46 = vrot.slane %v45, 2
      %v47 = vadd.f32 %v45, %v46
      %v48 = vrot.slane %v47, 1
      %v49 = vadd.f32 %v47, %v48
      %s50 = vtos %v49
      %s51 = sadd.f32 %s50, 0.0
      %v52 = vld [vmem:[%s1 + $0x8] sm:$0xff]
      %53 = vset.pattern.permute.xlu0 1
      %54 = vperm.xlu0 %53, %v21
      %v55 = vpop.permute.xlu0 %54
      %vm56 = vcmp.eq.s32.totalorder %v25, %v55
      %v57 = vsel %vm56, 1, 0
      %v58 = vcvt.s32.f32 %v57
      %v59 = vsub.f32 %v52, %v58
      %v60 = vand.u32 2147483647, %v59
      %v61 = vadd.s32 %v35, 8
      %vm62 = vcmp.lt.s32.totalorder %v61, 8
      %v63 = vsel %vm62, 1, 0
      %vm64 = vcmp.eq.s32.totalorder %v63, 1
      %v65 = vsel %vm64, %v60, 0.0
      %v66 = vsel %vm40, %v65, 0.0
      %67 = vadd.xlane.f32.xlu0 %v66
      %v68 = vpop.xlane.xlu0 %67
      %v69 = vrot.slane %v68, 4
      %v70 = vadd.f32 %v68, %v69
      %v71 = vrot.slane %v70, 2
      %v72 = vadd.f32 %v70, %v71
      %v73 = vrot.slane %v72, 1
      %v74 = vadd.f32 %v72, %v73
      %s75 = vtos %v74
      %s76 = sadd.f32 %s51, %s75
      %v77 = vld [vmem:[%s1 + $0x10] sm:$0xff]
      %78 = vset.pattern.permute.xlu0 2
      %79 = vperm.xlu0 %78, %v21
      %v80 = vpop.permute.xlu0 %79
      %vm81 = vcmp.eq.s32.totalorder %v25, %v80
      %v82 = vsel %vm81, 1, 0
      %v83 = vcvt.s32.f32 %v82
      %v84 = vsub.f32 %v77, %v83
      %v85 = vand.u32 2147483647, %v84
      %v86 = vadd.s32 %v35, 16
      %vm87 = vcmp.lt.s32.totalorder %v86, 8
      %v88 = vsel %vm87, 1, 0
      %vm89 = vcmp.eq.s32.totalorder %v88, 1
      %v90 = vsel %vm89, %v85, 0.0
      %v91 = vsel %vm40, %v90, 0.0
      %92 = vadd.xlane.f32.xlu0 %v91
      %v93 = vpop.xlane.xlu0 %92
      %v94 = vrot.slane %v93, 4
      %v95 = vadd.f32 %v93, %v94
      %v96 = vrot.slane %v95, 2
      %v97 = vadd.f32 %v95, %v96
      %v98 = vrot.slane %v97, 1
      %v99 = vadd.f32 %v97, %v98
      %s100 = vtos %v99
      %s101 = sadd.f32 %s76, %s100
      %v102 = vld [vmem:[%s1 + $0x18] sm:$0xff]
      %103 = vset.pattern.permute.xlu0 3
      %104 = vperm.xlu0 %103, %v21
      %v105 = vpop.permute.xlu0 %104
      %vm106 = vcmp.eq.s32.totalorder %v25, %v105
      %v107 = vsel %vm106, 1, 0
      %v108 = vcvt.s32.f32 %v107
      %v109 = vsub.f32 %v102, %v108
      %v110 = vand.u32 2147483647, %v109
      %v111 = vadd.s32 %v35, 24
      %vm112 = vcmp.lt.s32.totalorder %v111, 8
      %v113 = vsel %vm112, 1, 0
      %vm114 = vcmp.eq.s32.totalorder %v113, 1
      %v115 = vsel %vm114, %v110, 0.0
      %v116 = vsel %vm40, %v115, 0.0
      %117 = vadd.xlane.f32.xlu0 %v116
      %v118 = vpop.xlane.xlu0 %117
      %v119 = vrot.slane %v118, 4
      %v120 = vadd.f32 %v118, %v119
      %v121 = vrot.slane %v120, 2
      %v122 = vadd.f32 %v120, %v121
      %v123 = vrot.slane %v122, 1
      %v124 = vadd.f32 %v122, %v123
      %s125 = vtos %v124
      %s126 = sadd.f32 %s101, %s125
      %v127 = vstv %s126
      %128 = vst [vmem:[#allocation2] sm:$0xff] %v127
    $region17: #{tpu_custom_call.1} parent=1 // pred_fallthru
      _
    %p129 = scmp.ne.s32.totalorder 0, 0
    // Predicated region
    $region18: #{tpu_custom_call.1} parent=1 // pred_check
      %p130 = pneg %p129
    $region19: #{tpu_custom_call.1} parent=1 // pred_check_branch
      %132 = sbr.rel (%p130) target = $region21
    $region20: #{tpu_custom_call.1} parent=1 // pred_region
      %v133 = vld [vmem:[%s1] sm:$0xff]
      %v134 = vld [vmem:[%s2] sm:$0xff]
      %v135 = vlaneseq
      %v136 = vshrl.u32 %v135, 7
      %v137 = vsub.s32 0, %v136
      %v138 = vrot.slane %v15, %v137
      %139 = vset.pattern.permute.xlu0 0
      %140 = vperm.xlu0 %139, %v134
      %v141 = vpop.permute.xlu0 %140
      %vm142 = vcmp.eq.s32.totalorder %v138, %v141
      %v143 = vsel %vm142, 1, 0
      %v144 = vcvt.s32.f32 %v143
      %v145 = vsub.f32 %v133, %v144
      %v146 = vand.u32 2147483647, %v145
      %vm147 = vcmask 261120
      %v148 = vsel %vm147, %v146, 0.0
      %149 = vadd.xlane.f32.xlu0 %v148
      %v150 = vpop.xlane.xlu0 %149
      %v151 = vrot.slane %v150, 4
      %v152 = vadd.f32 %v150, %v151
      %v153 = vrot.slane %v152, 2
      %v154 = vadd.f32 %v152, %v153
      %v155 = vrot.slane %v154, 1
      %v156 = vadd.f32 %v154, %v155
      %s157 = vtos %v156
      %s158 = sadd.f32 %s157, 0.0
      %v159 = vld [vmem:[%s1 + $0x8] sm:$0xff]
      %160 = vset.pattern.permute.xlu0 1
      %161 = vperm.xlu0 %160, %v134
      %v162 = vpop.permute.xlu0 %161
      %vm163 = vcmp.eq.s32.totalorder %v138, %v162
      %v164 = vsel %vm163, 1, 0
      %v165 = vcvt.s32.f32 %v164
      %v166 = vsub.f32 %v159, %v165
      %v167 = vand.u32 2147483647, %v166
      %v168 = vsel %vm147, %v167, 0.0
      %169 = vadd.xlane.f32.xlu0 %v168
      %v170 = vpop.xlane.xlu0 %169
      %v171 = vrot.slane %v170, 4
      %v172 = vadd.f32 %v170, %v171
      %v173 = vrot.slane %v172, 2
      %v174 = vadd.f32 %v172, %v173
      %v175 = vrot.slane %v174, 1
      %v176 = vadd.f32 %v174, %v175
      %s177 = vtos %v176
      %s178 = sadd.f32 %s158, %s177
      %v179 = vld [vmem:[%s1 + $0x10] sm:$0xff]
      %180 = vset.pattern.permute.xlu0 2
      %181 = vperm.xlu0 %180, %v134
      %v182 = vpop.permute.xlu0 %181
      %vm183 = vcmp.eq.s32.totalorder %v138, %v182
      %v184 = vsel %vm183, 1, 0
      %v185 = vcvt.s32.f32 %v184
      %v186 = vsub.f32 %v179, %v185
      %v187 = vand.u32 2147483647, %v186
      %v188 = vsel %vm147, %v187, 0.0
      %189 = vadd.xlane.f32.xlu0 %v188
      %v190 = vpop.xlane.xlu0 %189
      %v191 = vrot.slane %v190, 4
      %v192 = vadd.f32 %v190, %v191
      %v193 = vrot.slane %v192, 2
      %v194 = vadd.f32 %v192, %v193
      %v195 = vrot.slane %v194, 1
      %v196 = vadd.f32 %v194, %v195
      %s197 = vtos %v196
      %s198 = sadd.f32 %s178, %s197
      %v199 = vld [vmem:[%s1 + $0x18] sm:$0xff]
      %200 = vset.pattern.permute.xlu0 3
      %201 = vperm.xlu0 %200, %v134
      %v202 = vpop.permute.xlu0 %201
      %vm203 = vcmp.eq.s32.totalorder %v138, %v202
      %v204 = vsel %vm203, 1, 0
      %v205 = vcvt.s32.f32 %v204
      %v206 = vsub.f32 %v199, %v205
      %v207 = vand.u32 2147483647, %v206
      %v208 = vsel %vm147, %v207, 0.0
      %209 = vadd.xlane.f32.xlu0 %v208
      %v210 = vpop.xlane.xlu0 %209
      %v211 = vrot.slane %v210, 4
      %v212 = vadd.f32 %v210, %v211
      %v213 = vrot.slane %v212, 2
      %v214 = vadd.f32 %v212, %v213
      %v215 = vrot.slane %v214, 1
      %v216 = vadd.f32 %v214, %v215
      %s217 = vtos %v216
      %s218 = sadd.f32 %s198, %s217
      %v219 = vstv %s218
      %220 = vst [vmem:[#allocation2] sm:$0xff] %v219
    $region21: #{tpu_custom_call.1} parent=1 // pred_fallthru
      _
    // Predicated region
    $region22: #{tpu_custom_call.1} parent=1 // pred_check
      _
    $region23: #{tpu_custom_call.1} parent=1 // pred_check_branch
      %222 = sbr.rel (0) target = $region25
    $region24: #{tpu_custom_call.1} parent=1 // pred_region
      %s224 = ssub.s32 128, 128
      %225 = vsyncadd [#allocation3], %s224
      %s227 = sshll.u32 [#allocation2], 4
      %s228 = int_to_ptr.vmem [resolvable:$true] %s227
      %230 = dma.vmem_to_hbm [thread:$0]  %s228, 128, %s3, [#allocation3]
    $region25: #{tpu_custom_call.1} parent=1 // pred_fallthru
      _
    // Predicated region
    $region26: #{tpu_custom_call.1} parent=1 // pred_check
      _
    $region27: #{tpu_custom_call.1} parent=1 // pred_check_branch
      %232 = sbr.rel (0) target = $region29
    $region28: #{tpu_custom_call.1} parent=1 // pred_region
      %233 = dma.done [#allocation3], 128
    $region29: #{tpu_custom_call.1} parent=1 // pred_fallthru
      _
    %234 = vsyncpa [#allocation3], 1

</llo_original>
